<compile_context>
chip_gen: v7x
topology: tpu7x:2x2x1
jax: 0.10.0
libtpu: 0.0.40
codegen_flags: <defaults>
</compile_context>

<pallas_src>
import functools
import math

import jax
import jax.numpy as jnp
from jax.experimental import pallas as pl
from jax.experimental.pallas import tpu as pltpu


def _round_up(x: int, m: int) -> int:
    return (x + m - 1) // m * m


def _pick_tile(dim: int, pref: int, align: int):
    """Choose (tile, padded_dim) for one dimension.

    Small dims use the full dimension as a single block (the block-shape
    "equal to full array dim" exception), which needs no padding at all.
    Large dims use the biggest aligned fraction of `pref` whose padding
    waste is <= 6.25%, falling back to the minimal-padding choice.
    """
    pref = max(align, _round_up(pref, align))
    if dim <= pref:
        return dim, dim
    best_t, best_pad = align, _round_up(dim, align)
    t = (pref // align) * align
    while t >= align:
        padded = _round_up(dim, t)
        if (padded - dim) * 16 <= dim:     # <= 6.25% waste: largest such tile
            return t, padded
        if padded < best_pad:
            best_t, best_pad = t, padded
        t = ((t // 2) // align) * align
    return best_t, best_pad


# --------------------------------------------------------------------------
# Kernel bodies (selected statically by the wrapper).
# --------------------------------------------------------------------------

def _single_k_kernel(has_bias: bool):
    """K fits in one tile: single dot, direct store."""
    def kernel(x_ref, w_ref, *rest):
        if has_bias:
            b_ref, o_ref = rest
        else:
            (o_ref,) = rest
        acc = jnp.dot(x_ref[...], w_ref[...],
                      preferred_element_type=jnp.float32)
        if has_bias:
            acc = acc + b_ref[...].astype(jnp.float32)
        o_ref[...] = acc.astype(o_ref.dtype)
    return kernel


def _multi_k_out_acc_kernel(has_bias: bool):
    """Multi-K, f32 output: accumulate straight into the resident output
    block (seeded with bias) -> no scratch, no finalize pass."""
    def kernel(x_ref, w_ref, *rest):
        if has_bias:
            b_ref, o_ref = rest
        else:
            (o_ref,) = rest

        @pl.when(pl.program_id(2) == 0)
        def _():
            if has_bias:
                o_ref[...] = jnp.broadcast_to(
                    b_ref[...].astype(jnp.float32), o_ref.shape)
            else:
                o_ref[...] = jnp.zeros_like(o_ref)

        o_ref[...] += jnp.dot(x_ref[...], w_ref[...],
                              preferred_element_type=jnp.float32)
    return kernel


def _multi_k_scratch_kernel(has_bias: bool):
    """Multi-K, non-f32 output: f32 scratch accumulator, finalize cast."""
    def kernel(x_ref, w_ref, *rest):
        if has_bias:
            b_ref, o_ref, acc_ref = rest
        else:
            o_ref, acc_ref = rest
        k = pl.program_id(2)

        @pl.when(k == 0)
        def _():
            acc_ref[...] = jnp.zeros_like(acc_ref)

        acc_ref[...] += jnp.dot(x_ref[...], w_ref[...],
                                preferred_element_type=jnp.float32)

        @pl.when(k == pl.num_programs(2) - 1)
        def _():
            acc = acc_ref[...]
            if has_bias:
                acc = acc + b_ref[...].astype(jnp.float32)
            o_ref[...] = acc.astype(o_ref.dtype)
    return kernel


# --------------------------------------------------------------------------
# Wrapper
# --------------------------------------------------------------------------

@functools.partial(jax.jit, static_argnames=("tm", "tn", "tk", "compute_dtype"))
def linear_forward(x, weight, bias=None, *, tm=256, tn=512, tk=512,
                   compute_dtype=None):
    """Pallas Linear forward: x @ weight (+ bias).

    x:      (..., in_features)
    weight: (in_features, out_features)
    bias:   (out_features,) or None
    """
    in_features, out_features = weight.shape
    lead_shape = x.shape[:-1]
    out_dtype = x.dtype
    M = math.prod(lead_shape) if lead_shape else 1

    if M == 0:
        return jnp.zeros((*lead_shape, out_features), out_dtype)

    x2 = x.reshape(M, in_features)
    if compute_dtype is not None:
        x2 = x2.astype(compute_dtype)
        weight = weight.astype(compute_dtype)

    itemsize = jnp.dtype(x2.dtype).itemsize
    m_align = {4: 8, 2: 16, 1: 32}.get(itemsize, 8)

    tm, M_pad = _pick_tile(M, tm, m_align)
    tn, N_pad = _pick_tile(out_features, tn, 128)
    tk, K_pad = _pick_tile(in_features, tk, 128)

    # Pad only when a dimension is actually ragged; aligned shapes (including
    # the demo config) take the copy-free path.
    if (M_pad, K_pad) != (M, in_features):
        x2 = jnp.pad(x2, ((0, M_pad - M), (0, K_pad - in_features)))
    if (K_pad, N_pad) != (in_features, out_features):
        # TODO(synk): in a real model, pre-pad the static weight once at init
        # instead of on every forward call.
        weight = jnp.pad(weight,
                         ((0, K_pad - in_features), (0, N_pad - out_features)))

    has_bias = bias is not None
    inputs = [x2, weight]
    if has_bias:
        b2 = bias.reshape(1, out_features)
        if N_pad != out_features:
            b2 = jnp.pad(b2, ((0, 0), (0, N_pad - out_features)))
        inputs.append(b2)

    gm, gn, gk = M_pad // tm, N_pad // tn, K_pad // tk
    multi_k = gk > 1
    acc_in_out = multi_k and out_dtype == jnp.float32   # no scratch needed

    if multi_k:
        grid = (gm, gn, gk)
        x_spec = pl.BlockSpec((tm, tk), lambda i, j, k: (i, k))
        w_spec = pl.BlockSpec((tk, tn), lambda i, j, k: (k, j))
        b_spec = pl.BlockSpec((1, tn), lambda i, j, k: (0, j))
        o_spec = pl.BlockSpec((tm, tn), lambda i, j, k: (i, j))
        scratch = [] if acc_in_out else [pltpu.VMEM((tm, tn), jnp.float32)]
        dims = ("parallel", "parallel", "arbitrary")
        kernel = (_multi_k_out_acc_kernel(has_bias) if acc_in_out
                  else _multi_k_scratch_kernel(has_bias))
    else:
        grid = (gm, gn)
        x_spec = pl.BlockSpec((tm, tk), lambda i, j: (i, 0))
        w_spec = pl.BlockSpec((tk, tn), lambda i, j: (0, j))
        b_spec = pl.BlockSpec((1, tn), lambda i, j: (0, j))
        o_spec = pl.BlockSpec((tm, tn), lambda i, j: (i, j))
        scratch = []
        dims = ("parallel", "parallel")
        kernel = _single_k_kernel(has_bias)

    in_specs = [x_spec, w_spec] + ([b_spec] if has_bias else [])

    # VMEM budget derived from the actual tile footprint (double buffers for
    # each pipelined operand + f32 accumulator); capped for v7x's 64 MiB VMEM.
    out_itemsize = jnp.dtype(out_dtype).itemsize
    bias_itemsize = jnp.dtype(bias.dtype).itemsize if has_bias else 0
    vmem_need = (
        2 * tm * tk * itemsize                              # x double-buffer
        + 2 * tk * tn * itemsize                            # W double-buffer
        + 2 * tm * tn * out_itemsize                        # output buffers
        + (tm * tn * 4 if (multi_k and not acc_in_out) else 0)  # f32 scratch
        + (2 * tn * bias_itemsize if has_bias else 0)       # bias buffer
    )
    vmem_limit = int(min(max(2 * vmem_need, 16 << 20), 48 << 20))

    out_p = pl.pallas_call(
        kernel,
        out_shape=jax.ShapeDtypeStruct((M_pad, N_pad), out_dtype),
        grid_spec=pltpu.PrefetchScalarGridSpec(
            num_scalar_prefetch=0,
            grid=grid,
            in_specs=in_specs,
            out_specs=o_spec,
            scratch_shapes=scratch,
        ),
        compiler_params=pltpu.CompilerParams(
            dimension_semantics=dims,
            vmem_limit_bytes=vmem_limit,
        ),
    )(*inputs)

    out = out_p
    if (M_pad, N_pad) != (M, out_features):
        out = out[:M, :out_features]
    return out.reshape(*lead_shape, out_features)


if __name__ == "__main__":
    key = jax.random.PRNGKey(0)
    k_w, k_b, k_x, k_w2, k_b2, k_x2, k_w3, k_b3, k_x3 = jax.random.split(key, 9)

    # --- Module config: Linear(in_features=32, out_features=64, bias=True) ---
    in_features, out_features, batch = 32, 64, 8
    weight = jax.random.uniform(k_w, (in_features, out_features), dtype=jnp.float32)
    bias = jax.random.uniform(k_b, (out_features,), dtype=jnp.float32)
    x = jax.random.uniform(k_x, (batch, in_features), dtype=jnp.float32)

    y = jax.block_until_ready(linear_forward(x, weight, bias))
    y_ref = x @ weight + bias
    assert y.shape == (batch, out_features)
    assert jnp.allclose(y, y_ref, atol=1e-5, rtol=1e-5)

    # --- Same config, bias=False path ---
    y_nb = jax.block_until_ready(linear_forward(x, weight))
    assert jnp.allclose(y_nb, x @ weight, atol=1e-5, rtol=1e-5)

    # --- Multi-K path, f32 output -> accumulate directly into output block ---
    K2, N2 = 256, 128
    w2 = jax.random.uniform(k_w2, (K2, N2), dtype=jnp.float32)
    b2 = jax.random.uniform(k_b2, (N2,), dtype=jnp.float32)
    x2 = jax.random.uniform(k_x2, (4, 16, K2), dtype=jnp.float32)

    y2 = jax.block_until_ready(linear_forward(x2, w2, b2, tm=64, tn=128, tk=128))
    y2_ref = jnp.einsum("bsk,kn->bsn", x2, w2,
                        precision=jax.lax.Precision.HIGHEST) + b2
    assert y2.shape == (4, 16, N2)
    assert jnp.allclose(y2, y2_ref, atol=1e-2, rtol=1e-2)

    # --- Multi-K path, bf16 output -> f32 scratch accumulator + cast ---
    K3, N3 = 256, 128
    w3 = jax.random.uniform(k_w3, (K3, N3), dtype=jnp.bfloat16)
    b3 = jax.random.uniform(k_b3, (N3,), dtype=jnp.bfloat16)
    x3 = jax.random.uniform(k_x3, (2, 16, K3), dtype=jnp.bfloat16)

    y3 = jax.block_until_ready(linear_forward(x3, w3, b3, tm=64, tn=128, tk=128))
    y3_ref = (jnp.einsum("bsk,kn->bsn", x3.astype(jnp.float32),
                         w3.astype(jnp.float32),
                         precision=jax.lax.Precision.HIGHEST)
              + b3.astype(jnp.float32))
    assert y3.shape == (2, 16, N3)
    assert jnp.allclose(y3.astype(jnp.float32), y3_ref, atol=5e-1, rtol=2e-2)

    print("KERNEL_OK")
</pallas_src>

<mosaic_0001>
module attributes {stable_mosaic.version = 11 : i64} {
  func.func @kernel(%arg0: i32, %arg1: i32, %arg2: memref<8x32xf32, #tpu.memory_space<vmem>>, %arg3: memref<32x64xf32, #tpu.memory_space<vmem>>, %arg4: memref<1x64xf32, #tpu.memory_space<vmem>>, %arg5: memref<8x64xf32, #tpu.memory_space<vmem>>) attributes {dimension_semantics = [#tpu.dimension_semantics<parallel>, #tpu.dimension_semantics<parallel>], iteration_bounds = array<i64: 1, 1>, scalar_prefetch = 0 : i64, scratch_operands = 0 : i64, tpu.core_type = #tpu.core_type<tc>, window_params = [{transform_indices = @transform_0, window_bounds = array<i64: 8, 32>}, {transform_indices = @transform_1, window_bounds = array<i64: 32, 64>}, {transform_indices = @transform_2, window_bounds = array<i64: 1, 64>}, {transform_indices = @transform_3, window_bounds = array<i64: 8, 64>}]} {
    %c0 = arith.constant 0 : index
    %c0_0 = arith.constant 0 : index
    %0 = vector.load %arg2[%c0, %c0_0] : memref<8x32xf32, #tpu.memory_space<vmem>>, vector<8x32xf32>
    %c0_1 = arith.constant 0 : index
    %c0_2 = arith.constant 0 : index
    %1 = vector.load %arg3[%c0_1, %c0_2] : memref<32x64xf32, #tpu.memory_space<vmem>>, vector<32x64xf32>
    %cst = arith.constant dense<0.000000e+00> : vector<8x64xf32>
    %2 = tpu.matmul %0, %1, %cst {dimension_numbers = #tpu.dot_dimension_numbers<[1], [0], [0], [1], [0, 0, 1, 1], [], []>} : vector<8x32xf32>, vector<32x64xf32>, vector<8x64xf32> -> vector<8x64xf32>
    %c0_3 = arith.constant 0 : index
    %c0_4 = arith.constant 0 : index
    %3 = vector.load %arg4[%c0_3, %c0_4] : memref<1x64xf32, #tpu.memory_space<vmem>>, vector<1x64xf32>
    %4 = vector.broadcast %3 : vector<1x64xf32> to vector<8x64xf32>
    %5 = arith.addf %2, %4 : vector<8x64xf32>
    %c0_5 = arith.constant 0 : index
    %c0_6 = arith.constant 0 : index
    %6 = vector.load %arg5[%c0_5, %c0_6] : memref<8x64xf32, #tpu.memory_space<vmem>>, vector<8x64xf32>
    tpu.vector_store %arg5[%c0_5, %c0_6], %5 {strides = array<i32>} : memref<8x64xf32, #tpu.memory_space<vmem>>, vector<8x64xf32>,
    return
  }
  func.func @transform_0(%arg0: i32, %arg1: i32) -> (i32, i32) {
    %c0_i32 = arith.constant 0 : i32
    %c0_i32_0 = arith.constant 0 : i32
    return %arg0, %c0_i32 : i32, i32
  }
  func.func @transform_1(%arg0: i32, %arg1: i32) -> (i32, i32) {
    %c0_i32 = arith.constant 0 : i32
    %c0_i32_0 = arith.constant 0 : i32
    return %c0_i32, %arg1 : i32, i32
  }
  func.func @transform_2(%arg0: i32, %arg1: i32) -> (i32, i32) {
    %c0_i32 = arith.constant 0 : i32
    %c0_i32_0 = arith.constant 0 : i32
    return %c0_i32, %arg1 : i32, i32
  }
  func.func @transform_3(%arg0: i32, %arg1: i32) -> (i32, i32) {
    %c0_i32 = arith.constant 0 : i32
    return %arg0, %arg1 : i32, i32
  }
}

</mosaic_0001>

<llo_original>
// kernel: linear_forward.1
$region0: #{linear_forward.1}
  #allocation0 [shape = 'u32[]', space=smem, size = 0x4, offset = 0x4, fixed_abs, tag = 'smem constant byte address 0x4 - core index']
  #allocation1 [shape = 'u32[144,128]{1,0:T(1,128)}', space=vmem, size = 0x12000, scoped, tag = 'internal scratch']
  %s0 = inlined_call_operand.hbm [shape: f32[8,32], index: 0, kind: input, shape index: {}]
  %s1 = inlined_call_operand.hbm [shape: f32[32,64], index: 1, kind: input, shape index: {}]
  %s2 = inlined_call_operand.vmem [shape: f32[1,64], index: 2, kind: input, shape index: {}]
  %s3 = inlined_call_operand.hbm [shape: f32[8,64], index: 3, kind: output, shape index: {}]
  %s4 = sld [smem:[#allocation0]]
  $region30: #{linear_forward.1} parent=0
    _
  %s6 = ssub.s32 1, %s4
  %s7 = scalar_select 0, %s6, %s4
  $region1: #{linear_forward.1} parent=0
    #allocation2 [shape = 'u8[4096]{0}', space=vmem, size = 0x1000, scoped, tag = 'input window, operand 0, single buffered']
    #allocation3 [shape = 's32[1]{0}', space=sflag, size = 0x4, scoped, tag = 'scoped memory for linear_forward.1']
    #allocation4 [shape = 's32[1]{0}', space=sflag, size = 0x4, scoped, tag = 'scoped memory for linear_forward.1']
    #allocation5 [shape = 'u8[16384]{0}', space=vmem, size = 0x4000, scoped, tag = 'input window, operand 1, single buffered']
    #allocation6 [shape = 's32[1]{0}', space=sflag, size = 0x4, scoped, tag = 'scoped memory for linear_forward.1']
    #allocation7 [shape = 'u8[4096]{0}', space=vmem, size = 0x1000, scoped, tag = 'output window, operand 0, single buffered']
    %8 = vsyncpa [#allocation3], 0
    %9 = vsyncpa [#allocation6], 0
    %10 = vsyncpa [#allocation4], 0
    // Predicated region
    $region2: #{linear_forward.1} parent=1 // pred_check
      _
    $region3: #{linear_forward.1} parent=1 // pred_check_branch
      %12 = sbr.rel (0) target = $region5
    $region4: #{linear_forward.1} parent=1 // pred_region
      %s14 = ssub.s32 128, 128
      %15 = vsyncadd [#allocation3], %s14
      %s17 = sshll.u32 [#allocation2], 4
      %s18 = int_to_ptr.vmem [resolvable:$true] %s17
      %20 = dma.hbm_to_vmem [thread:$0]  %s0, 128, %s18, [#allocation3]
    $region5: #{linear_forward.1} parent=1 // pred_fallthru
      _
    // Predicated region
    $region6: #{linear_forward.1} parent=1 // pred_check
      _
    $region7: #{linear_forward.1} parent=1 // pred_check_branch
      %22 = sbr.rel (0) target = $region9
    $region8: #{linear_forward.1} parent=1 // pred_region
      %s24 = ssub.s32 512, 512
      %25 = vsyncadd [#allocation6], %s24
      %s26 = sshll.u32 [#allocation5], 4
      %s27 = int_to_ptr.vmem [resolvable:$true] %s26
      %32 = dma.hbm_to_vmem [thread:$0]  %s1, 512, %s27, [#allocation6], 128, 128, 8
    $region9: #{linear_forward.1} parent=1 // pred_fallthru
      _
    // Predicated region
    $region10: #{linear_forward.1} parent=1 // pred_check
      _
    $region11: #{linear_forward.1} parent=1 // pred_check_branch
      %34 = sbr.rel (0) target = $region13
    $region12: #{linear_forward.1} parent=1 // pred_region
      _
    $region13: #{linear_forward.1} parent=1 // pred_fallthru
      _
    // Predicated region
    $region14: #{linear_forward.1} parent=1 // pred_check
      _
    $region15: #{linear_forward.1} parent=1 // pred_check_branch
      %36 = sbr.rel (0) target = $region17
    $region16: #{linear_forward.1} parent=1 // pred_region
      %37 = dma.done [#allocation3], 128
    $region17: #{linear_forward.1} parent=1 // pred_fallthru
      _
    // Predicated region
    $region18: #{linear_forward.1} parent=1 // pred_check
      _
    $region19: #{linear_forward.1} parent=1 // pred_check_branch
      %39 = sbr.rel (0) target = $region21
    $region20: #{linear_forward.1} parent=1 // pred_region
      %40 = dma.done [#allocation6], 512
    $region21: #{linear_forward.1} parent=1 // pred_fallthru
      _
    %v41 = vld [vmem:[#allocation2] sm:$0xff]
    %v42 = vld [vmem:[#allocation5] sm:$0xff]
    %v43 = vld [vmem:[#allocation5 + $0x8] sm:$0xff]
    %v44 = vld [vmem:[#allocation5 + $0x10] sm:$0xff]
    %v45 = vld [vmem:[#allocation5 + $0x18] sm:$0xff]
    %v46 = vld [vmem:[%s2] sm:$0x1]
    %v48 = vlaneseq
    %v49 = vshrl.u32 %v48, 7
    %v50 = vsub.s32 0, %v49
    %v51 = vrot.slane %v46, %v50
    %vm53 = vcmask 261120
    %v55 = vsel %vm53, %v41, 0
    %57 = vmatprep.subr.mxu0 0.0
    %58 = vmatpush1.msra.mxu0 %v42
    %59 = vmatprep.subr.mxu0 0.0
    %60 = vmatpush1.msra.mxu0 %v43
    %61 = vmatprep.subr.mxu0 0.0
    %62 = vmatpush1.msra.mxu0 %v44
    %63 = vmatprep.subr.mxu0 0.0
    %64 = vmatpush1.msra.mxu0 %v45
    %65 = vmatprep.subr.mxu0 0.0
    %66 = vmatpush1.msra.mxu0 0.0
    %67 = vmatprep.subr.mxu0 0.0
    %68 = vmatpush1.msra.mxu0 0.0
    %69 = vmatprep.subr.mxu0 0.0
    %70 = vmatpush1.msra.mxu0 0.0
    %71 = vmatprep.subr.mxu0 0.0
    %72 = vmatpush1.msra.mxu0 0.0
    %73 = vmatprep.subr.mxu0 0.0
    %74 = vmatpush1.msra.mxu0 0.0
    %75 = vmatprep.subr.mxu0 0.0
    %76 = vmatpush1.msra.mxu0 0.0
    %77 = vmatprep.subr.mxu0 0.0
    %78 = vmatpush1.msra.mxu0 0.0
    %79 = vmatprep.subr.mxu0 0.0
    %80 = vmatpush1.msra.mxu0 0.0
    %81 = vmatprep.subr.mxu0 0.0
    %82 = vmatpush1.msra.mxu0 0.0
    %83 = vmatprep.subr.mxu0 0.0
    %84 = vmatpush1.msra.mxu0 0.0
    %85 = vmatprep.subr.mxu0 0.0
    %86 = vmatpush1.msra.mxu0 0.0
    %87 = vmatprep.subr.mxu0 0.0
    %88 = vmatpush1.msra.mxu0 0.0
    %89 = vmatprep.subr.mxu0 0.0
    %90 = vmatpush1.msra.mxu0 0.0
    %91 = vmatprep.subr.mxu0 0.0
    %92 = vmatpush1.msra.mxu0 0.0
    %93 = vmatprep.subr.mxu0 0.0
    %94 = vmatpush1.msra.mxu0 0.0
    %95 = vmatprep.subr.mxu0 0.0
    %96 = vmatpush1.msra.mxu0 0.0
    %97 = vmatprep.subr.mxu0 0.0
    %98 = vmatpush1.msra.mxu0 0.0
    %99 = vmatprep.subr.mxu0 0.0
    %100 = vmatpush1.msra.mxu0 0.0
    %101 = vmatprep.subr.mxu0 0.0
    %102 = vmatpush1.msra.mxu0 0.0
    %103 = vmatprep.subr.mxu0 0.0
    %104 = vmatpush1.msra.mxu0 0.0
    %105 = vmatprep.subr.mxu0 0.0
    %106 = vmatpush1.msra.mxu0 0.0
    %107 = vmatprep.subr.mxu0 0.0
    %108 = vmatpush1.msra.mxu0 0.0
    %109 = vmatprep.subr.mxu0 0.0
    %110 = vmatpush1.msra.mxu0 0.0
    %111 = vmatprep.subr.mxu0 0.0
    %112 = vmatpush1.msra.mxu0 0.0
    %113 = vmatprep.subr.mxu0 0.0
    %114 = vmatpush1.msra.mxu0 0.0
    %115 = vmatprep.subr.mxu0 0.0
    %116 = vmatpush1.msra.mxu0 0.0
    %117 = vmatprep.subr.mxu0 0.0
    %118 = vmatpush1.msra.mxu0 0.0
    %119 = vmatprep.subr.mxu0 0.0
    %120 = vmatpush1.msra.mxu0 0.0
    %121 = vmatprep.mubr.f32.mxu0 0.0
    %122 = vmatmul.mubr.f32.gmra.mrb[0].mxu0 %v55
    %v123 = vpop.f32.mrb[0].mxu0
    %v124 = vadd.f32 %v51, %v123
    %v125 = vpop.f32.mrb[0].mxu0
    %126 = vdwg.mxu0
    %vm127 = vcmask 523264
    %128 = vst.msk [vmem:[#allocation7] sm:$0xff] %vm127, %v124
    // Predicated region
    $region22: #{linear_forward.1} parent=1 // pred_check
      _
    $region23: #{linear_forward.1} parent=1 // pred_check_branch
      %130 = sbr.rel (0) target = $region25
    $region24: #{linear_forward.1} parent=1 // pred_region
      %s132 = ssub.s32 128, 128
      %133 = vsyncadd [#allocation4], %s132
      %s135 = sshll.u32 [#allocation7], 4
      %s136 = int_to_ptr.vmem [resolvable:$true] %s135
      %138 = dma.vmem_to_hbm [thread:$0]  %s136, 128, %s3, [#allocation4]
    $region25: #{linear_forward.1} parent=1 // pred_fallthru
      _
    // Predicated region
    $region26: #{linear_forward.1} parent=1 // pred_check
      _
    $region27: #{linear_forward.1} parent=1 // pred_check_branch
      %140 = sbr.rel (0) target = $region29
    $region28: #{linear_forward.1} parent=1 // pred_region
      %141 = dma.done [#allocation4], 128
    $region29: #{linear_forward.1} parent=1 // pred_fallthru
      _
    %142 = vsyncpa [#allocation3], 1
    %143 = vsyncpa [#allocation6], 1
    %144 = vsyncpa [#allocation4], 1

</llo_original>
